<compile_context>
chip_gen: v7x
topology: tpu7x:2x2x1
jax: 0.10.0
libtpu: 0.0.40
codegen_flags: <defaults>
</compile_context>

<pallas_src>
import jax
import jax.numpy as jnp
from jax.experimental import pallas as pl
from jax.experimental.pallas import tpu as pltpu


def _ce_loss_kernel(x_ref, t_ref, out_ref, acc_ref):
    """Masked CrossEntropyLoss tile: x (C, tile_n) logits, t (K, tile_n) class ids (float, maybe NaN)."""
    i = pl.program_id(0)

    @pl.when(i == 0)
    def _init():
        acc_ref[0] = jnp.float32(0.0)   # running sum of per-row losses
        acc_ref[1] = jnp.float32(0.0)   # running count of valid rows

    x = x_ref[...].astype(jnp.float32)                                        # (C, tile_n)
    t = t_ref[...].astype(jnp.float32)                                        # (K, tile_n)

    # mask = torch.isnan(t).any(1).bitwise_not_()  -> lane-dense (1, tile_n)
    valid = jnp.logical_not(jnp.any(jnp.isnan(t), axis=0, keepdims=True))     # (1, tile_n)
    tgt = jnp.where(valid, t[0:1, :], 0.0).astype(jnp.int32)                  # (1, tile_n)

    # CrossEntropyLoss(reduction='none'): logsumexp over classes - x[tgt]
    m = jnp.max(x, axis=0, keepdims=True)                                     # (1, tile_n)
    lse = m + jnp.log(jnp.sum(jnp.exp(x - m), axis=0, keepdims=True))         # (1, tile_n)
    cls = jax.lax.broadcasted_iota(jnp.int32, x.shape, 0)                     # (C, tile_n)
    x_at_tgt = jnp.sum(jnp.where(cls == tgt, x, 0.0), axis=0, keepdims=True)  # (1, tile_n)
    per_row = lse - x_at_tgt                                                  # (1, tile_n)

    vf = valid.astype(jnp.float32)
    acc_ref[0] += jnp.sum(per_row * vf)
    acc_ref[1] += jnp.sum(vf)

    @pl.when(i == pl.num_programs(0) - 1)
    def _finalize():
        count = acc_ref[1]
        out_ref[0, 0] = jnp.where(count > 0.0, acc_ref[0] / count, jnp.float32(jnp.nan))


def _bce_loss_kernel(x_ref, t_ref, out_ref, acc_ref):
    """Masked BCEWithLogitsLoss tile: x (1, tile_n) logits, t (K, tile_n) targets (float, maybe NaN)."""
    i = pl.program_id(0)

    @pl.when(i == 0)
    def _init():
        acc_ref[0] = jnp.float32(0.0)
        acc_ref[1] = jnp.float32(0.0)

    x = x_ref[...].astype(jnp.float32)                                        # (1, tile_n)
    t = t_ref[...].astype(jnp.float32)                                        # (K, tile_n)

    valid = jnp.logical_not(jnp.any(jnp.isnan(t), axis=0, keepdims=True))     # (1, tile_n)
    t_safe = jnp.where(valid, t[0:1, :], 0.0)                                 # (1, tile_n)

    # Numerically-stable BCEWithLogits: max(x, 0) - x*t + log1p(exp(-|x|))
    per_row = jnp.maximum(x, 0.0) - x * t_safe + jnp.log1p(jnp.exp(-jnp.abs(x)))

    vf = valid.astype(jnp.float32)
    acc_ref[0] += jnp.sum(per_row * vf)
    acc_ref[1] += jnp.sum(vf)

    @pl.when(i == pl.num_programs(0) - 1)
    def _finalize():
        count = acc_ref[1]
        out_ref[0, 0] = jnp.where(count > 0.0, acc_ref[0] / count, jnp.float32(jnp.nan))


def _round_up(n, m):
    return ((n + m - 1) // m) * m


def _masked_mean_loss(x2, t2, n_channels, tile_n=None):
    """x2: (N, C) logits (native dtype); t2: (N, K) float targets (NaN rows masked)."""
    N, C = x2.shape
    K = t2.shape[1]

    # Targets need a float dtype to carry NaN padding / masks.
    if not jnp.issubdtype(t2.dtype, jnp.floating):
        t2 = t2.astype(jnp.float32)

    # Tile size: lane axis multiple of 128; biggest reasonable block, capped so that
    # 2 inputs x 2 pipeline buffers x block stays far under v7x's 32 MiB scoped VMEM.
    if tile_n is None:
        tile_n = min(1024, _round_up(max(N, 1), 128))
    tile_n = _round_up(tile_n, 128)
    n_pad = _round_up(max(N, 1), tile_n)

    # Lane-dense layout: class/target axis on sublanes, row axis on lanes.
    xT = jnp.transpose(x2)   # (C, N), native dtype (no wrapper upcast)
    tT = jnp.transpose(t2)   # (K, N)
    if n_pad != N:
        xT = jnp.pad(xT, ((0, 0), (0, n_pad - N)))
        # Padded rows get NaN targets -> masked out inside the kernel.
        tT = jnp.pad(tT, ((0, 0), (0, n_pad - N)), constant_values=float("nan"))

    kernel = _bce_loss_kernel if n_channels == 1 else _ce_loss_kernel
    out = pl.pallas_call(
        kernel,
        out_shape=jax.ShapeDtypeStruct((1, 1), jnp.float32),
        grid=(n_pad // tile_n,),
        in_specs=[
            pl.BlockSpec((C, tile_n), lambda i: (0, i)),
            pl.BlockSpec((K, tile_n), lambda i: (0, i)),
        ],
        out_specs=pl.BlockSpec(memory_space=pltpu.SMEM),
        scratch_shapes=[pltpu.SMEM((2,), jnp.float32)],
        compiler_params=pltpu.CompilerParams(dimension_semantics=("arbitrary",)),
    )(xT, tT)
    return out[0, 0]


def category_loss_forward(x, t, n_channels, tile_n=None, check_finite=False):
    """Mirrors CategoryLoss.forward / compute_loss.

    Returns [loss] where loss is a scalar (NaN if no valid target rows), or [None] if t is None.
    `check_finite=True` reinstates the eager PyTorch isfinite raise (debug only; forces a sync).
    """
    if t is None:
        return [None]

    # Plain-JAX glue: the reshapes from compute_loss (no dtype upcast here).
    c_x = x.shape[1]
    x2 = jnp.reshape(x, (-1, c_x))          # (N, C)
    c_t = t.shape[0]
    t2 = jnp.reshape(t, (c_t, -1))          # (N, K)
    assert x2.shape[0] == t2.shape[0], "row counts of x and t must match"

    loss = _masked_mean_loss(x2, t2, n_channels, tile_n=tile_n)

    if check_finite:  # debug-only path: device->host sync
        if not bool(jnp.isfinite(loss)) and bool(jnp.any(~jnp.isnan(jnp.sum(t2, axis=1)))):
            raise Exception("found a loss that is not finite: {}".format(loss))
    return [loss]


# ----------------------------- pure-JAX references -----------------------------

def _ref_ce(x2, t2):
    valid = ~jnp.any(jnp.isnan(t2), axis=1)
    xv = x2[valid]
    tv = jnp.where(jnp.isnan(t2), 0.0, t2)[valid].astype(jnp.int32)[:, 0]
    lse = jax.scipy.special.logsumexp(xv, axis=1)
    ce = lse - xv[jnp.arange(xv.shape[0]), tv]
    return jnp.mean(ce)


def _ref_bce(x2, t2):
    valid = ~jnp.any(jnp.isnan(t2), axis=1)
    xv = x2[valid]
    tv = jnp.where(jnp.isnan(t2), 0.0, t2)[valid]
    per = jnp.maximum(xv, 0.0) - xv * tv + jnp.log1p(jnp.exp(-jnp.abs(xv)))
    return jnp.mean(per)


if __name__ == "__main__":
    key = jax.random.PRNGKey(0)
    k1, k2, k3, k4, k5, k6 = jax.random.split(key, 6)

    # --- Multi-class case (n_channels > 1): x is NCHW [B, C, 1, 1], t is [B, 1] class ids ---
    B, C = 8, 16
    x_mc = jax.random.normal(k1, (B, C, 1, 1), dtype=jnp.float32)
    t_mc = jax.random.randint(k2, (B, 1), 0, C).astype(jnp.float32)
    t_mc = t_mc.at[3, 0].set(jnp.nan)   # one invalid (NaN) target row -> masked out

    loss_mc = category_loss_forward(x_mc, t_mc, n_channels=C)[0]
    loss_mc = jax.block_until_ready(loss_mc)
    ref_mc = _ref_ce(x_mc.reshape(-1, C), t_mc.reshape(B, -1))
    assert jnp.allclose(loss_mc, ref_mc, rtol=1e-5, atol=1e-5), (loss_mc, ref_mc)

    # --- Binary case (n_channels == 1): x is [B, 1, 1, 1], t is [B, 1] in {0, 1} ---
    x_bin = jax.random.normal(k3, (B, 1, 1, 1), dtype=jnp.float32)
    t_bin = (jax.random.uniform(k4, (B, 1)) > 0.5).astype(jnp.float32)
    t_bin = t_bin.at[5, 0].set(jnp.nan)

    loss_bin = category_loss_forward(x_bin, t_bin, n_channels=1)[0]
    loss_bin = jax.block_until_ready(loss_bin)
    ref_bin = _ref_bce(x_bin.reshape(-1, 1), t_bin.reshape(B, -1))
    assert jnp.allclose(loss_bin, ref_bin, rtol=1e-5, atol=1e-5), (loss_bin, ref_bin)

    # --- Larger multi-tile case: bf16 logits, N=300 rows, tile_n=128 -> 3 grid steps ---
    N2, C2 = 300, 16
    x_big = jax.random.normal(k5, (N2, C2, 1, 1), dtype=jnp.bfloat16)
    t_big = jax.random.randint(k6, (N2, 1), 0, C2).astype(jnp.float32)
    t_big = t_big.at[17, 0].set(jnp.nan)

    loss_big = category_loss_forward(x_big, t_big, n_channels=C2, tile_n=128)[0]
    loss_big = jax.block_until_ready(loss_big)
    ref_big = _ref_ce(x_big.reshape(-1, C2).astype(jnp.float32), t_big.reshape(N2, -1))
    assert jnp.allclose(loss_big, ref_big, rtol=1e-4, atol=1e-4), (loss_big, ref_big)

    print("KERNEL_OK")
</pallas_src>

<mosaic_0001>
module attributes {stable_mosaic.version = 11 : i64} {
  func.func @_ce_loss_kernel(%arg0: i32, %arg1: memref<16x128xf32, #tpu.memory_space<vmem>>, %arg2: memref<1x128xf32, #tpu.memory_space<vmem>>, %arg3: memref<1x1xf32, #tpu.memory_space<smem>>, %arg4: memref<2xf32, #tpu.memory_space<smem>>) attributes {dimension_semantics = [#tpu.dimension_semantics<arbitrary>], iteration_bounds = array<i64: 1>, scalar_prefetch = 0 : i64, scratch_operands = 1 : i64, tpu.core_type = #tpu.core_type<tc>, window_params = [{transform_indices = @transform_0, window_bounds = array<i64: 16, 128>}, {transform_indices = @transform_1, window_bounds = array<i64: 1, 128>}, {transform_indices = @transform_2, window_bounds = array<i64: 1, 1>}]} {
    %c0_i32 = arith.constant 0 : i32
    %0 = arith.cmpi eq, %arg0, %c0_i32 : i32
    %1 = arith.extui %0 : i1 to i32
    %c0_i32_0 = arith.constant 0 : i32
    %2 = arith.cmpi ne, %1, %c0_i32_0 : i32
    scf.if %2 {
      %cst_20 = arith.constant 0.000000e+00 : f32
      %c0_21 = arith.constant 0 : index
      %54 = memref.load %arg4[%c0_21] : memref<2xf32, #tpu.memory_space<smem>>
      memref.store %cst_20, %arg4[%c0_21] : memref<2xf32, #tpu.memory_space<smem>>
      %cst_22 = arith.constant 0.000000e+00 : f32
      %c1_23 = arith.constant 1 : index
      %55 = memref.load %arg4[%c1_23] : memref<2xf32, #tpu.memory_space<smem>>
      memref.store %cst_22, %arg4[%c1_23] : memref<2xf32, #tpu.memory_space<smem>>
    } else {
    }
    %c0 = arith.constant 0 : index
    %c0_1 = arith.constant 0 : index
    %3 = vector.load %arg1[%c0, %c0_1] : memref<16x128xf32, #tpu.memory_space<vmem>>, vector<16x128xf32>
    %c0_2 = arith.constant 0 : index
    %c0_3 = arith.constant 0 : index
    %4 = vector.load %arg2[%c0_2, %c0_3] : memref<1x128xf32, #tpu.memory_space<vmem>>, vector<1x128xf32>
    %5 = arith.cmpf one, %4, %4 : vector<1x128xf32>
    %cst = arith.constant 1.000000e+00 : f32
    %cst_4 = arith.constant 0.000000e+00 : f32
    %6 = vector.broadcast %cst : f32 to vector<1x128xf32>
    %7 = vector.broadcast %cst_4 : f32 to vector<1x128xf32>
    %8 = arith.select %5, %6, %7 : vector<1x128xi1>, vector<1x128xf32>
    %cst_5 = arith.constant dense<0xFF800000> : vector<128xf32>
    %9 = vector.multi_reduction <maximumf>, %8, %cst_5 [0] : vector<1x128xf32> to vector<128xf32>
    %cst_6 = arith.constant 0.000000e+00 : f32
    %10 = vector.broadcast %cst_6 : f32 to vector<128xf32>
    %11 = arith.cmpf ogt, %9, %10 : vector<128xf32>
    %12 = vector.shape_cast %11 : vector<128xi1> to vector<1x128xi1>
    %cst_7 = arith.constant dense<true> : vector<1x128xi1>
    %13 = arith.xori %12, %cst_7 : vector<1x128xi1>
    %cst_8 = arith.constant 0.000000e+00 : f32
    %14 = vector.broadcast %cst_8 : f32 to vector<1x128xf32>
    %15 = arith.select %13, %4, %14 : vector<1x128xi1>, vector<1x128xf32>
    %16 = arith.fptosi %15 : vector<1x128xf32> to vector<1x128xi32>
    %cst_9 = arith.constant dense<0xFF800000> : vector<128xf32>
    %17 = vector.multi_reduction <maximumf>, %3, %cst_9 [0] : vector<16x128xf32> to vector<128xf32>
    %18 = vector.shape_cast %17 : vector<128xf32> to vector<1x128xf32>
    %19 = vector.broadcast %18 : vector<1x128xf32> to vector<16x128xf32>
    %20 = arith.subf %3, %19 : vector<16x128xf32>
    %21 = math.exp %20 : vector<16x128xf32>
    %cst_10 = arith.constant dense<0.000000e+00> : vector<128xf32>
    %22 = vector.multi_reduction <add>, %21, %cst_10 [0] : vector<16x128xf32> to vector<128xf32>
    %23 = vector.shape_cast %22 : vector<128xf32> to vector<1x128xf32>
    %24 = math.log %23 : vector<1x128xf32>
    %25 = arith.addf %18, %24 : vector<1x128xf32>
    %26 = tpu.iota {dimensions = array<i32: 0>} : vector<16x128xi32>
    %27 = vector.broadcast %16 : vector<1x128xi32> to vector<16x128xi32>
    %28 = arith.cmpi eq, %26, %27 : vector<16x128xi32>
    %cst_11 = arith.constant 0.000000e+00 : f32
    %29 = vector.broadcast %cst_11 : f32 to vector<16x128xf32>
    %30 = arith.select %28, %3, %29 : vector<16x128xi1>, vector<16x128xf32>
    %cst_12 = arith.constant dense<0.000000e+00> : vector<128xf32>
    %31 = vector.multi_reduction <add>, %30, %cst_12 [0] : vector<16x128xf32> to vector<128xf32>
    %32 = vector.shape_cast %31 : vector<128xf32> to vector<1x128xf32>
    %33 = arith.subf %25, %32 : vector<1x128xf32>
    %34 = arith.extui %13 : vector<1x128xi1> to vector<1x128xi32>
    %35 = arith.sitofp %34 : vector<1x128xi32> to vector<1x128xf32>
    %c0_13 = arith.constant 0 : index
    %36 = memref.load %arg4[%c0_13] : memref<2xf32, #tpu.memory_space<smem>>
    %37 = arith.mulf %33, %35 : vector<1x128xf32>
    %38 = vector.shape_cast %37 : vector<1x128xf32> to vector<1x1x128xf32>
    %cst_14 = arith.constant dense<0.000000e+00> : vector<1xf32>
    %39 = vector.multi_reduction <add>, %38, %cst_14 [1, 2] : vector<1x1x128xf32> to vector<1xf32>
    %40 = vector.shape_cast %39 : vector<1xf32> to vector<1x1x1xf32>
    %41 = vector.extract %40[0, 0, 0] : f32 from vector<1x1x1xf32>
    %42 = arith.addf %36, %41 : f32
    %c0_15 = arith.constant 0 : index
    %43 = memref.load %arg4[%c0_15] : memref<2xf32, #tpu.memory_space<smem>>
    memref.store %42, %arg4[%c0_15] : memref<2xf32, #tpu.memory_space<smem>>
    %c1 = arith.constant 1 : index
    %44 = memref.load %arg4[%c1] : memref<2xf32, #tpu.memory_space<smem>>
    %45 = vector.shape_cast %35 : vector<1x128xf32> to vector<1x1x128xf32>
    %cst_16 = arith.constant dense<0.000000e+00> : vector<1xf32>
    %46 = vector.multi_reduction <add>, %45, %cst_16 [1, 2] : vector<1x1x128xf32> to vector<1xf32>
    %47 = vector.shape_cast %46 : vector<1xf32> to vector<1x1x1xf32>
    %48 = vector.extract %47[0, 0, 0] : f32 from vector<1x1x1xf32>
    %49 = arith.addf %44, %48 : f32
    %c1_17 = arith.constant 1 : index
    %50 = memref.load %arg4[%c1_17] : memref<2xf32, #tpu.memory_space<smem>>
    memref.store %49, %arg4[%c1_17] : memref<2xf32, #tpu.memory_space<smem>>
    %c0_i32_18 = arith.constant 0 : i32
    %51 = arith.cmpi eq, %arg0, %c0_i32_18 : i32
    %52 = arith.extui %51 : i1 to i32
    %c0_i32_19 = arith.constant 0 : i32
    %53 = arith.cmpi ne, %52, %c0_i32_19 : i32
    scf.if %53 {
      %c1_20 = arith.constant 1 : index
      %54 = memref.load %arg4[%c1_20] : memref<2xf32, #tpu.memory_space<smem>>
      %cst_21 = arith.constant 0.000000e+00 : f32
      %55 = arith.cmpf ogt, %54, %cst_21 : f32
      %c0_22 = arith.constant 0 : index
      %56 = memref.load %arg4[%c0_22] : memref<2xf32, #tpu.memory_space<smem>>
      %57 = arith.divf %56, %54 : f32
      %cst_23 = arith.constant 0x7FC00000 : f32
      %58 = arith.select %55, %57, %cst_23 : f32
      %c0_24 = arith.constant 0 : index
      %c0_25 = arith.constant 0 : index
      %59 = memref.load %arg3[%c0_24, %c0_25] : memref<1x1xf32, #tpu.memory_space<smem>>
      memref.store %58, %arg3[%c0_24, %c0_25] : memref<1x1xf32, #tpu.memory_space<smem>>
    } else {
    }
    return
  }
  func.func @transform_0(%arg0: i32) -> (i32, i32) {
    %c0_i32 = arith.constant 0 : i32
    %c0_i32_0 = arith.constant 0 : i32
    return %c0_i32, %arg0 : i32, i32
  }
  func.func @transform_1(%arg0: i32) -> (i32, i32) {
    %c0_i32 = arith.constant 0 : i32
    %c0_i32_0 = arith.constant 0 : i32
    return %c0_i32, %arg0 : i32, i32
  }
  func.func @transform_2(%arg0: i32) -> (i32, i32) {
    %c0_i32 = arith.constant 0 : i32
    %c0_i32_0 = arith.constant 0 : i32
    %c0_i32_1 = arith.constant 0 : i32
    return %c0_i32, %c0_i32_0 : i32, i32
  }
}

</mosaic_0001>

<llo_original>
// kernel: tpu_custom_call.1
$region0: #{tpu_custom_call.1}
  #allocation0 [shape = 'u32[]', space=smem, size = 0x4, offset = 0x4, fixed_abs, tag = 'smem constant byte address 0x4 - core index']
  #allocation1 [shape = 'u32[144,128]{1,0:T(1,128)}', space=vmem, size = 0x12000, scoped, tag = 'internal scratch']
  #allocation2 [shape = 'f32[2]{0:T(128)}', space=smem, size = 0x200, scoped, tag = 'scratch operand']
  %s0 = inlined_call_operand.hbm [shape: f32[16,128], index: 0, kind: input, shape index: {}]
  %s1 = inlined_call_operand.vmem [shape: f32[1,128], index: 1, kind: input, shape index: {}]
  %s2 = inlined_call_operand.hbm [shape: f32[1,1], index: 2, kind: output, shape index: {}]
  %s3 = sld [smem:[#allocation0]]
  $region30: #{tpu_custom_call.1} parent=0
    _
  %s5 = ssub.s32 1, %s3
  %s6 = scalar_select 0, %s5, %s3
  $region1: #{tpu_custom_call.1} parent=0
    #allocation3 [shape = 'u8[8192]{0}', space=vmem, size = 0x2000, scoped, tag = 'input window, operand 0, single buffered']
    #allocation4 [shape = 's32[1]{0}', space=sflag, size = 0x4, scoped, tag = 'scoped memory for tpu_custom_call.1']
    #allocation5 [shape = 's32[1]{0}', space=sflag, size = 0x4, scoped, tag = 'scoped memory for tpu_custom_call.1']
    #allocation6 [shape = 'u8[512]{0}', space=smem, size = 0x200, scoped, tag = 'output window, operand 0, single buffered']
    %7 = vsyncpa [#allocation4], 0
    %8 = vsyncpa [#allocation5], 0
    // Predicated region
    $region2: #{tpu_custom_call.1} parent=1 // pred_check
      _
    $region3: #{tpu_custom_call.1} parent=1 // pred_check_branch
      %10 = sbr.rel (0) target = $region5
    $region4: #{tpu_custom_call.1} parent=1 // pred_region
      %s12 = ssub.s32 256, 256
      %13 = vsyncadd [#allocation4], %s12
      %s14 = sshll.u32 [#allocation3], 4
      %s15 = int_to_ptr.vmem [resolvable:$true] %s14
      %20 = dma.hbm_to_vmem [thread:$0]  %s0, 256, %s15, [#allocation4], 128, 128, 8
    $region5: #{tpu_custom_call.1} parent=1 // pred_fallthru
      _
    // Predicated region
    $region6: #{tpu_custom_call.1} parent=1 // pred_check
      _
    $region7: #{tpu_custom_call.1} parent=1 // pred_check_branch
      %22 = sbr.rel (0) target = $region9
    $region8: #{tpu_custom_call.1} parent=1 // pred_region
      _
    $region9: #{tpu_custom_call.1} parent=1 // pred_fallthru
      _
    // Predicated region
    $region10: #{tpu_custom_call.1} parent=1 // pred_check
      _
    $region11: #{tpu_custom_call.1} parent=1 // pred_check_branch
      %24 = sbr.rel (0) target = $region13
    $region12: #{tpu_custom_call.1} parent=1 // pred_region
      %25 = dma.done [#allocation4], 256
    $region13: #{tpu_custom_call.1} parent=1 // pred_fallthru
      _
    %p26 = scmp.eq.s32.totalorder 0, 0
    // Predicated region
    $region14: #{tpu_custom_call.1} parent=1 // pred_check
      %p27 = pneg %p26
    $region15: #{tpu_custom_call.1} parent=1 // pred_check_branch
      %29 = sbr.rel (%p27) target = $region17
    $region16: #{tpu_custom_call.1} parent=1 // pred_region
      %s30 = scalar_lea.smem [#allocation2], 0
      %31 = sst [smem:[%s30]] 0.0
      %s32 = scalar_lea.smem [#allocation2], 1
      %33 = sst [smem:[%s32]] 0.0
    $region17: #{tpu_custom_call.1} parent=1 // pred_fallthru
      _
    %v34 = vld [vmem:[#allocation3] sm:$0xff]
    %v35 = vld [vmem:[#allocation3 + $0x8] sm:$0xff]
    %v36 = vld [vmem:[%s1] sm:$0x1]
    %vm37 = vcmp.ne.f32.partialorder %v36, %v36
    %v38 = vsel %vm37, 1.0, 0.0
    %vm39 = vcmp.gt.f32.partialorder %v38, 0.0
    %vm40 = vmxor %vm39, 1
    %v41 = vsel %vm40, %v36, 0.0
    %v42 = vcvt.f32.s32.to.zero.pseudo %v41
    %v43 = vmax.f32 %v34, %v35
    %v44 = vrot.slane %v43, 4
    %v45 = vmax.f32 %v43, %v44
    %v46 = vrot.slane %v45, 2
    %v47 = vmax.f32 %v45, %v46
    %v48 = vrot.slane %v47, 1
    %v49 = vmax.f32 %v47, %v48
    %v50 = vsub.f32 %v34, %v49
    %v51 = vsub.f32 %v35, %v49
    %v52 = vmul.f32 %v50, 1.442695
    %v53 = vpow.pop %v52
    %v54 = vmul.f32 %v51, 1.442695
    %v55 = vpow.pop %v54
    %v56 = vadd.f32 %v53, %v55
    %v57 = vrot.slane %v56, 4
    %v58 = vadd.f32 %v56, %v57
    %v59 = vrot.slane %v58, 2
    %v60 = vadd.f32 %v58, %v59
    %v61 = vrot.slane %v60, 1
    %v62 = vadd.f32 %v60, %v61
    %v63 = vlog2.pop %v62
    %v64 = vmul.f32 %v63, 0.6931472
    %v65 = vadd.f32 %v49, %v64
    %v66 = vlaneseq
    %v67 = vshrl.u32 %v66, 7
    %v68 = vadd.s32 %v67, 8
    %v69 = vlaneseq
    %v70 = vshrl.u32 %v69, 7
    %v71 = vsub.s32 0, %v70
    %v72 = vrot.slane %v42, %v71
    %vm73 = vcmp.eq.s32.totalorder %v67, %v72
    %vm74 = vcmp.eq.s32.totalorder %v68, %v72
    %v75 = vsel %vm73, %v34, 0.0
    %v76 = vsel %vm74, %v35, 0.0
    %v77 = vadd.f32 %v75, %v76
    %v78 = vrot.slane %v77, 4
    %v79 = vadd.f32 %v77, %v78
    %v80 = vrot.slane %v79, 2
    %v81 = vadd.f32 %v79, %v80
    %v82 = vrot.slane %v81, 1
    %v83 = vadd.f32 %v81, %v82
    %v84 = vsub.f32 %v65, %v83
    %v85 = vsel %vm40, 1, 0
    %v86 = vcvt.s32.f32 %v85
    %s87 = sld [smem:[#allocation2]]
    %v88 = vmul.f32 %v84, %v86
    %vm89 = vcmask 1040384
    %v90 = vsel %vm89, %v88, 0.0
    %91 = vadd.xlane.f32.xlu0 %v90
    %v92 = vpop.xlane.xlu0 %91
    %v93 = vrot.slane %v92, 4
    %v94 = vadd.f32 %v92, %v93
    %v95 = vrot.slane %v94, 2
    %v96 = vadd.f32 %v94, %v95
    %v97 = vrot.slane %v96, 1
    %v98 = vadd.f32 %v96, %v97
    %s99 = vtos %v98
    %s100 = sadd.f32 %s87, %s99
    %s101 = scalar_lea.smem [#allocation2], 0
    %102 = sst [smem:[%s101]] %s100
    %s103 = sld [smem:[#allocation2 + $0x1]]
    %v104 = vsel %vm89, %v86, 0.0
    %105 = vadd.xlane.f32.xlu0 %v104
    %v106 = vpop.xlane.xlu0 %105
    %v107 = vrot.slane %v106, 4
    %v108 = vadd.f32 %v106, %v107
    %v109 = vrot.slane %v108, 2
    %v110 = vadd.f32 %v108, %v109
    %v111 = vrot.slane %v110, 1
    %v112 = vadd.f32 %v110, %v111
    %s113 = vtos %v112
    %s114 = sadd.f32 %s103, %s113
    %s115 = scalar_lea.smem [#allocation2], 1
    %116 = sst [smem:[%s115]] %s114
    // Predicated region
    $region18: #{tpu_custom_call.1} parent=1 // pred_check
      %p117 = pneg %p26
    $region19: #{tpu_custom_call.1} parent=1 // pred_check_branch
      %119 = sbr.rel (%p117) target = $region21
    $region20: #{tpu_custom_call.1} parent=1 // pred_region
      %s120 = sld [smem:[#allocation2 + $0x1]]
      %p121 = scmp.gt.f32.partialorder %s120, 0.0
      %s122 = sld [smem:[#allocation2]]
      %v123 = vstv %s120
      %v124 = vrcp.pop %v123
      %s125 = vtos %v124
      %s126 = smul.f32 %s122, %s125
      %s127 = scalar_select %p121, %s126, nan
      %s128 = scalar_lea.smem [#allocation6], 0
      %129 = sst [smem:[%s128]] %s127
    $region21: #{tpu_custom_call.1} parent=1 // pred_fallthru
      _
    // Predicated region
    $region22: #{tpu_custom_call.1} parent=1 // pred_check
      _
    $region23: #{tpu_custom_call.1} parent=1 // pred_check_branch
      %131 = sbr.rel (0) target = $region25
    $region24: #{tpu_custom_call.1} parent=1 // pred_region
      %s133 = ssub.s32 16, 16
      %134 = vsyncadd [#allocation5], %s133
      %137 = dma.smem_to_hbm [#allocation6], 16, %s2, [#allocation5]
    $region25: #{tpu_custom_call.1} parent=1 // pred_fallthru
      _
    // Predicated region
    $region26: #{tpu_custom_call.1} parent=1 // pred_check
      _
    $region27: #{tpu_custom_call.1} parent=1 // pred_check_branch
      %139 = sbr.rel (0) target = $region29
    $region28: #{tpu_custom_call.1} parent=1 // pred_region
      %140 = dma.done [#allocation5], 16
    $region29: #{tpu_custom_call.1} parent=1 // pred_fallthru
      _
    %141 = sfence
    %142 = vsyncpa [#allocation4], 1
    %143 = vsyncpa [#allocation5], 1

</llo_original>
